<compile_context>
chip_gen: v7x
topology: tpu7x:2x2x1
jax: 0.10.0
libtpu: 0.0.40
codegen_flags: <defaults>
</compile_context>

<pallas_src>
import math

import jax
import jax.numpy as jnp
import numpy as np
from jax import lax
from jax.experimental import pallas as pl
from jax.experimental.pallas import tpu as pltpu

# Small, module-consistent shapes
N_AGENTS = 8
BSZ = 2
TOTAL = N_AGENTS * BSZ
INPUT_SIZE = 16
H_DIM = 32
EMBED_DIM = 32          # embed_dim defaults to h_dim
K_ROUNDS = 3            # self.K
NORM_FACTOR = 1.0 / math.sqrt(H_DIM)   # 1/sqrt(key_dim), key_dim == h_dim for n_heads=1


def mpnn_fwd_kernel(x_ref, wenc_ref, bstack_ref, wqkvmu_ref, o_ref):
    # x: (TOTAL, INPUT_SIZE), rows kept in agent-major torch order (row = a*BSZ + b)
    x = x_ref[...]

    # Hoist all weight/bias loads + bias broadcasts out of the unrolled K loop.
    w_enc = wenc_ref[...]
    b_enc = jnp.broadcast_to(bstack_ref[0:1, :], (TOTAL, H_DIM))
    b_upd = jnp.broadcast_to(bstack_ref[1:2, :], (TOTAL, H_DIM))
    w_qkvmu = wqkvmu_ref[...]   # (H, 4H) = [W_q | W_k | W_val@W_out@W_upd_m | W_upd_h]

    # In-kernel block-diagonal additive mask: agents only attend within their own
    # batch element.  Agent-major layout => batch index of row r is r % BSZ.
    rows = lax.broadcasted_iota(jnp.int32, (TOTAL, TOTAL), 0)
    cols = lax.broadcasted_iota(jnp.int32, (TOTAL, TOTAL), 1)
    mask_bias = jnp.where((rows % BSZ) == (cols % BSZ), 0.0, -1e30)

    # encoder: Linear(input_size, h_dim) + ReLU, all BSZ*N_AGENTS rows at once
    h = jnp.maximum(
        jnp.dot(x, w_enc, preferred_element_type=jnp.float32) + b_enc, 0.0)

    # K rounds of single-head attention message passing + update (weights shared)
    for _ in range(K_ROUNDS):
        # fused Q / K / folded-value / update-h projection: one lane-dense MXU push
        proj = jnp.dot(h, w_qkvmu, preferred_element_type=jnp.float32)   # (T, 4H)
        q = proj[:, 0 * H_DIM:1 * H_DIM]
        k = proj[:, 1 * H_DIM:2 * H_DIM]
        vm = proj[:, 2 * H_DIM:3 * H_DIM]    # h @ (W_val @ W_out @ W_upd_m)
        uh = proj[:, 3 * H_DIM:4 * H_DIM]    # h @ W_upd_h

        # contraction over the shared last dim (no explicit k.T transpose)
        scores = NORM_FACTOR * lax.dot_general(
            q, k, dimension_numbers=(((1,), (1,)), ((), ())),
            preferred_element_type=jnp.float32)                          # (T, T)
        scores = scores + mask_bias

        # numerically-stable softmax over the last axis
        scores = scores - jnp.max(scores, axis=-1, keepdims=True)
        e = jnp.exp(scores)
        inv_den = pl.reciprocal(jnp.sum(e, axis=-1, keepdims=True), approx=True)
        attn = e * inv_den

        # folded message path: attn @ (h @ (W_val @ W_out @ W_upd_m)) == m @ W_upd_m
        m = jnp.dot(attn, vm, preferred_element_type=jnp.float32)        # (T, H)

        # update: Linear(h_dim + embed_dim, h_dim) + ReLU (concat split into matmuls,
        # with the h-part already produced by the fused projection above)
        h = jnp.maximum(uh + m + b_upd, 0.0)

    o_ref[...] = h   # single (TOTAL, H_DIM) store


def fuse_params(params):
    """One-time parameter setup: fold value path + update weight, stack biases."""
    w_enc, b_enc, wq, wk, wv, wout, wuh, wum, b_upd = params
    # heads @ W_out @ W_upd_m == attn @ (h @ (W_val @ W_out @ W_upd_m))  (exact fold)
    w_vm = wv @ wout @ wum                                       # (H, H)
    w_qkvmu = jnp.concatenate([wq, wk, w_vm, wuh], axis=1)       # (H, 4H) = (32, 128)
    b_stack = jnp.concatenate([b_enc, b_upd], axis=0)            # (2, H)
    return w_enc, b_stack, w_qkvmu


@jax.jit
def mpnn_fwd_pallas(inp, w_enc, b_stack, w_qkvmu):
    """inp: (num_agents * bsz, input_size) — same agent-major row layout PyTorch uses."""
    x = inp[:, :INPUT_SIZE]
    vmem = pltpu.MemorySpace.VMEM
    # Single invocation (no grid): whole problem (~25 KB) lives in VMEM, so
    # per-grid-step / per-core overhead would only add latency (v5e/v6e/v7x alike).
    return pl.pallas_call(
        mpnn_fwd_kernel,
        out_shape=jax.ShapeDtypeStruct((TOTAL, H_DIM), jnp.float32),
        in_specs=[pl.BlockSpec(memory_space=vmem)] * 4,   # whole arrays in VMEM
        out_specs=pl.BlockSpec(memory_space=vmem),
    )(x, w_enc, b_stack, w_qkvmu)


def mpnn_fwd_reference(inp, params):
    """Pure-JAX mirror of MPNN._fwd (entity_mp=False, mask=None, n_heads=1)."""
    w_enc, b_enc, wq, wk, wv, wout, wuh, wum, b_upd = params
    agent_inp = inp[:, :INPUT_SIZE]
    h = jnp.maximum(agent_inp @ w_enc + b_enc, 0.0)                      # (N*B, H)
    h = h.reshape(N_AGENTS, BSZ, H_DIM).transpose(1, 0, 2)               # (B, N, H)
    for _ in range(K_ROUNDS):
        q = h @ wq
        k = h @ wk
        v = h @ wv
        compat = NORM_FACTOR * jnp.einsum('bnd,bmd->bnm', q, k)
        attn = jax.nn.softmax(compat, axis=-1)
        heads = jnp.einsum('bnm,bmd->bnd', attn, v)
        m = heads @ wout
        h = jnp.maximum(h @ wuh + m @ wum + b_upd, 0.0)
    return h.transpose(1, 0, 2).reshape(N_AGENTS * BSZ, H_DIM)


def init_params(key):
    ks = jax.random.split(key, 8)
    scale = 0.1
    w_enc = scale * jax.random.normal(ks[0], (INPUT_SIZE, H_DIM), jnp.float32)
    b_enc = jnp.zeros((1, H_DIM), jnp.float32)          # biases zero, like weights_init
    wq = scale * jax.random.normal(ks[1], (H_DIM, H_DIM), jnp.float32)
    wk = scale * jax.random.normal(ks[2], (H_DIM, H_DIM), jnp.float32)
    wv = scale * jax.random.normal(ks[3], (H_DIM, H_DIM), jnp.float32)
    wout = scale * jax.random.normal(ks[4], (H_DIM, EMBED_DIM), jnp.float32)
    # update Linear(h_dim + embed_dim, h_dim), split along its input axis
    wuh = scale * jax.random.normal(ks[5], (H_DIM, H_DIM), jnp.float32)
    wum = scale * jax.random.normal(ks[6], (EMBED_DIM, H_DIM), jnp.float32)
    b_upd = jnp.zeros((1, H_DIM), jnp.float32)
    return (w_enc, b_enc, wq, wk, wv, wout, wuh, wum, b_upd)


if __name__ == "__main__":
    key = jax.random.PRNGKey(0)
    pkey, xkey = jax.random.split(key)
    params = init_params(pkey)
    inp = jax.random.normal(xkey, (N_AGENTS * BSZ, INPUT_SIZE), jnp.float32)

    # one-time weight fusion (parameter-setup time, not per forward call)
    w_enc_f, b_stack, w_qkvmu = fuse_params(params)

    out = mpnn_fwd_pallas(inp, w_enc_f, b_stack, w_qkvmu)
    out = jax.block_until_ready(out)

    ref = jax.block_until_ready(mpnn_fwd_reference(inp, params))
    assert out.shape == (N_AGENTS * BSZ, H_DIM)
    # Tolerance relaxed vs the exact-path version: fused QKVMU projection, the
    # W_val@W_out@W_upd_m fold and the approx EUP reciprocal change FP
    # accumulation order / softmax denominator rounding.
    np.testing.assert_allclose(np.asarray(out), np.asarray(ref), rtol=2e-3, atol=1e-3)

    print("KERNEL_OK")
</pallas_src>

<mosaic_0001>
module attributes {stable_mosaic.version = 11 : i64} {
  func.func @mpnn_fwd_kernel(%arg0: memref<16x16xf32, #tpu.memory_space<vmem>>, %arg1: memref<16x32xf32, #tpu.memory_space<vmem>>, %arg2: memref<2x32xf32, #tpu.memory_space<vmem>>, %arg3: memref<32x128xf32, #tpu.memory_space<vmem>>, %arg4: memref<16x32xf32, #tpu.memory_space<vmem>>) attributes {dimension_semantics = [], scalar_prefetch = 0 : i64, scratch_operands = 0 : i64, tpu.core_type = #tpu.core_type<tc>} {
    %c0 = arith.constant 0 : index
    %c0_0 = arith.constant 0 : index
    %0 = vector.load %arg0[%c0, %c0_0] : memref<16x16xf32, #tpu.memory_space<vmem>>, vector<16x16xf32>
    %c0_1 = arith.constant 0 : index
    %c0_2 = arith.constant 0 : index
    %1 = vector.load %arg1[%c0_1, %c0_2] : memref<16x32xf32, #tpu.memory_space<vmem>>, vector<16x32xf32>
    %c0_3 = arith.constant 0 : index
    %c0_4 = arith.constant 0 : index
    %2 = vector.load %arg2[%c0_3, %c0_4] : memref<2x32xf32, #tpu.memory_space<vmem>>, vector<1x32xf32>
    %3 = vector.shape_cast %2 : vector<1x32xf32> to vector<1x32xf32>
    %4 = vector.broadcast %3 : vector<1x32xf32> to vector<16x32xf32>
    %c1 = arith.constant 1 : index
    %c0_5 = arith.constant 0 : index
    %5 = vector.load %arg2[%c1, %c0_5] : memref<2x32xf32, #tpu.memory_space<vmem>>, vector<1x32xf32>
    %6 = vector.shape_cast %5 : vector<1x32xf32> to vector<1x32xf32>
    %7 = vector.broadcast %6 : vector<1x32xf32> to vector<16x32xf32>
    %c0_6 = arith.constant 0 : index
    %c0_7 = arith.constant 0 : index
    %8 = vector.load %arg3[%c0_6, %c0_7] : memref<32x128xf32, #tpu.memory_space<vmem>>, vector<32x128xf32>
    %9 = tpu.iota {dimensions = array<i32: 0>} : vector<16x16xi32>
    %10 = tpu.iota {dimensions = array<i32: 1>} : vector<16x16xi32>
    %c2_i32 = arith.constant 2 : i32
    %c0_i32 = arith.constant 0 : i32
    %11 = arith.cmpi eq, %c2_i32, %c0_i32 : i32
    %c1_i32 = arith.constant 1 : i32
    %12 = arith.select %11, %c1_i32, %c2_i32 : i32
    %13 = vector.broadcast %12 : i32 to vector<16x16xi32>
    %14 = arith.remsi %9, %13 : vector<16x16xi32>
    %c0_i32_8 = arith.constant 0 : i32
    %15 = vector.broadcast %c0_i32_8 : i32 to vector<16x16xi32>
    %16 = arith.cmpi ne, %14, %15 : vector<16x16xi32>
    %c0_i32_9 = arith.constant 0 : i32
    %17 = vector.broadcast %c0_i32_9 : i32 to vector<16x16xi32>
    %18 = arith.cmpi slt, %14, %17 : vector<16x16xi32>
    %c0_i32_10 = arith.constant 0 : i32
    %19 = arith.cmpi slt, %12, %c0_i32_10 : i32
    %20 = vector.broadcast %19 : i1 to vector<16x16xi1>
    %21 = vector.broadcast %20 : vector<16x16xi1> to vector<16x16xi1>
    %22 = arith.xori %18, %21 : vector<16x16xi1>
    %23 = arith.andi %22, %16 : vector<16x16xi1>
    %24 = vector.broadcast %12 : i32 to vector<16x16xi32>
    %25 = arith.addi %14, %24 : vector<16x16xi32>
    %26 = arith.select %23, %25, %14 : vector<16x16xi1>, vector<16x16xi32>
    %c2_i32_11 = arith.constant 2 : i32
    %c0_i32_12 = arith.constant 0 : i32
    %27 = arith.cmpi eq, %c2_i32_11, %c0_i32_12 : i32
    %c1_i32_13 = arith.constant 1 : i32
    %28 = arith.select %27, %c1_i32_13, %c2_i32_11 : i32
    %29 = vector.broadcast %28 : i32 to vector<16x16xi32>
    %30 = arith.remsi %10, %29 : vector<16x16xi32>
    %c0_i32_14 = arith.constant 0 : i32
    %31 = vector.broadcast %c0_i32_14 : i32 to vector<16x16xi32>
    %32 = arith.cmpi ne, %30, %31 : vector<16x16xi32>
    %c0_i32_15 = arith.constant 0 : i32
    %33 = vector.broadcast %c0_i32_15 : i32 to vector<16x16xi32>
    %34 = arith.cmpi slt, %30, %33 : vector<16x16xi32>
    %c0_i32_16 = arith.constant 0 : i32
    %35 = arith.cmpi slt, %28, %c0_i32_16 : i32
    %36 = vector.broadcast %35 : i1 to vector<16x16xi1>
    %37 = vector.broadcast %36 : vector<16x16xi1> to vector<16x16xi1>
    %38 = arith.xori %34, %37 : vector<16x16xi1>
    %39 = arith.andi %38, %32 : vector<16x16xi1>
    %40 = vector.broadcast %28 : i32 to vector<16x16xi32>
    %41 = arith.addi %30, %40 : vector<16x16xi32>
    %42 = arith.select %39, %41, %30 : vector<16x16xi1>, vector<16x16xi32>
    %43 = arith.cmpi eq, %26, %42 : vector<16x16xi32>
    %cst = arith.constant 0.000000e+00 : f32
    %cst_17 = arith.constant -1.000000e+30 : f32
    %44 = vector.broadcast %cst : f32 to vector<16x16xf32>
    %45 = vector.broadcast %cst_17 : f32 to vector<16x16xf32>
    %46 = arith.select %43, %44, %45 : vector<16x16xi1>, vector<16x16xf32>
    %cst_18 = arith.constant dense<0.000000e+00> : vector<16x32xf32>
    %47 = tpu.matmul %0, %1, %cst_18 {dimension_numbers = #tpu.dot_dimension_numbers<[1], [0], [0], [1], [0, 0, 1, 1], [], []>} : vector<16x16xf32>, vector<16x32xf32>, vector<16x32xf32> -> vector<16x32xf32>
    %48 = arith.addf %47, %4 : vector<16x32xf32>
    %cst_19 = arith.constant 0.000000e+00 : f32
    %49 = vector.broadcast %cst_19 : f32 to vector<16x32xf32>
    %50 = arith.maximumf %48, %49 : vector<16x32xf32>
    %cst_20 = arith.constant dense<0.000000e+00> : vector<16x128xf32>
    %51 = tpu.matmul %50, %8, %cst_20 {dimension_numbers = #tpu.dot_dimension_numbers<[1], [0], [0], [1], [0, 0, 1, 1], [], []>} : vector<16x32xf32>, vector<32x128xf32>, vector<16x128xf32> -> vector<16x128xf32>
    %52 = vector.extract_strided_slice %51 {offsets = [0, 0], sizes = [16, 32], strides = [1, 1]} : vector<16x128xf32> to vector<16x32xf32>
    %53 = vector.extract_strided_slice %51 {offsets = [0, 32], sizes = [16, 32], strides = [1, 1]} : vector<16x128xf32> to vector<16x32xf32>
    %54 = vector.extract_strided_slice %51 {offsets = [0, 64], sizes = [16, 32], strides = [1, 1]} : vector<16x128xf32> to vector<16x32xf32>
    %55 = vector.extract_strided_slice %51 {offsets = [0, 96], sizes = [16, 32], strides = [1, 1]} : vector<16x128xf32> to vector<16x32xf32>
    %cst_21 = arith.constant dense<0.000000e+00> : vector<16x16xf32>
    %56 = tpu.matmul %52, %53, %cst_21 {dimension_numbers = #tpu.dot_dimension_numbers<[1], [1], [0], [0], [0, 0, 1, 0], [], []>} : vector<16x32xf32>, vector<16x32xf32>, vector<16x16xf32> -> vector<16x16xf32>
    %cst_22 = arith.constant 0.176776692 : f32
    %57 = vector.broadcast %cst_22 : f32 to vector<16x16xf32>
    %58 = arith.mulf %57, %56 : vector<16x16xf32>
    %59 = arith.addf %58, %46 : vector<16x16xf32>
    %cst_23 = arith.constant dense<0xFF800000> : vector<16xf32>
    %60 = vector.multi_reduction <maximumf>, %59, %cst_23 [1] : vector<16x16xf32> to vector<16xf32>
    %61 = vector.shape_cast %60 : vector<16xf32> to vector<16x1xf32>
    %62 = vector.broadcast %61 : vector<16x1xf32> to vector<16x16xf32>
    %63 = arith.subf %59, %62 : vector<16x16xf32>
    %64 = math.exp %63 : vector<16x16xf32>
    %cst_24 = arith.constant dense<0.000000e+00> : vector<16xf32>
    %65 = vector.multi_reduction <add>, %64, %cst_24 [1] : vector<16x16xf32> to vector<16xf32>
    %66 = vector.shape_cast %65 : vector<16xf32> to vector<16x1xf32>
    %67 = tpu.reciprocal %66 {approx = true} : vector<16x1xf32> -> vector<16x1xf32>
    %68 = vector.broadcast %67 : vector<16x1xf32> to vector<16x16xf32>
    %69 = arith.mulf %64, %68 : vector<16x16xf32>
    %cst_25 = arith.constant dense<0.000000e+00> : vector<16x32xf32>
    %70 = tpu.matmul %69, %54, %cst_25 {dimension_numbers = #tpu.dot_dimension_numbers<[1], [0], [0], [1], [0, 0, 1, 1], [], []>} : vector<16x16xf32>, vector<16x32xf32>, vector<16x32xf32> -> vector<16x32xf32>
    %71 = arith.addf %55, %70 : vector<16x32xf32>
    %72 = arith.addf %71, %7 : vector<16x32xf32>
    %cst_26 = arith.constant 0.000000e+00 : f32
    %73 = vector.broadcast %cst_26 : f32 to vector<16x32xf32>
    %74 = arith.maximumf %72, %73 : vector<16x32xf32>
    %cst_27 = arith.constant dense<0.000000e+00> : vector<16x128xf32>
    %75 = tpu.matmul %74, %8, %cst_27 {dimension_numbers = #tpu.dot_dimension_numbers<[1], [0], [0], [1], [0, 0, 1, 1], [], []>} : vector<16x32xf32>, vector<32x128xf32>, vector<16x128xf32> -> vector<16x128xf32>
    %76 = vector.extract_strided_slice %75 {offsets = [0, 0], sizes = [16, 32], strides = [1, 1]} : vector<16x128xf32> to vector<16x32xf32>
    %77 = vector.extract_strided_slice %75 {offsets = [0, 32], sizes = [16, 32], strides = [1, 1]} : vector<16x128xf32> to vector<16x32xf32>
    %78 = vector.extract_strided_slice %75 {offsets = [0, 64], sizes = [16, 32], strides = [1, 1]} : vector<16x128xf32> to vector<16x32xf32>
    %79 = vector.extract_strided_slice %75 {offsets = [0, 96], sizes = [16, 32], strides = [1, 1]} : vector<16x128xf32> to vector<16x32xf32>
    %cst_28 = arith.constant dense<0.000000e+00> : vector<16x16xf32>
    %80 = tpu.matmul %76, %77, %cst_28 {dimension_numbers = #tpu.dot_dimension_numbers<[1], [1], [0], [0], [0, 0, 1, 0], [], []>} : vector<16x32xf32>, vector<16x32xf32>, vector<16x16xf32> -> vector<16x16xf32>
    %cst_29 = arith.constant 0.176776692 : f32
    %81 = vector.broadcast %cst_29 : f32 to vector<16x16xf32>
    %82 = arith.mulf %81, %80 : vector<16x16xf32>
    %83 = arith.addf %82, %46 : vector<16x16xf32>
    %cst_30 = arith.constant dense<0xFF800000> : vector<16xf32>
    %84 = vector.multi_reduction <maximumf>, %83, %cst_30 [1] : vector<16x16xf32> to vector<16xf32>
    %85 = vector.shape_cast %84 : vector<16xf32> to vector<16x1xf32>
    %86 = vector.broadcast %85 : vector<16x1xf32> to vector<16x16xf32>
    %87 = arith.subf %83, %86 : vector<16x16xf32>
    %88 = math.exp %87 : vector<16x16xf32>
    %cst_31 = arith.constant dense<0.000000e+00> : vector<16xf32>
    %89 = vector.multi_reduction <add>, %88, %cst_31 [1] : vector<16x16xf32> to vector<16xf32>
    %90 = vector.shape_cast %89 : vector<16xf32> to vector<16x1xf32>
    %91 = tpu.reciprocal %90 {approx = true} : vector<16x1xf32> -> vector<16x1xf32>
    %92 = vector.broadcast %91 : vector<16x1xf32> to vector<16x16xf32>
    %93 = arith.mulf %88, %92 : vector<16x16xf32>
    %cst_32 = arith.constant dense<0.000000e+00> : vector<16x32xf32>
    %94 = tpu.matmul %93, %78, %cst_32 {dimension_numbers = #tpu.dot_dimension_numbers<[1], [0], [0], [1], [0, 0, 1, 1], [], []>} : vector<16x16xf32>, vector<16x32xf32>, vector<16x32xf32> -> vector<16x32xf32>
    %95 = arith.addf %79, %94 : vector<16x32xf32>
    %96 = arith.addf %95, %7 : vector<16x32xf32>
    %cst_33 = arith.constant 0.000000e+00 : f32
    %97 = vector.broadcast %cst_33 : f32 to vector<16x32xf32>
    %98 = arith.maximumf %96, %97 : vector<16x32xf32>
    %cst_34 = arith.constant dense<0.000000e+00> : vector<16x128xf32>
    %99 = tpu.matmul %98, %8, %cst_34 {dimension_numbers = #tpu.dot_dimension_numbers<[1], [0], [0], [1], [0, 0, 1, 1], [], []>} : vector<16x32xf32>, vector<32x128xf32>, vector<16x128xf32> -> vector<16x128xf32>
    %100 = vector.extract_strided_slice %99 {offsets = [0, 0], sizes = [16, 32], strides = [1, 1]} : vector<16x128xf32> to vector<16x32xf32>
    %101 = vector.extract_strided_slice %99 {offsets = [0, 32], sizes = [16, 32], strides = [1, 1]} : vector<16x128xf32> to vector<16x32xf32>
    %102 = vector.extract_strided_slice %99 {offsets = [0, 64], sizes = [16, 32], strides = [1, 1]} : vector<16x128xf32> to vector<16x32xf32>
    %103 = vector.extract_strided_slice %99 {offsets = [0, 96], sizes = [16, 32], strides = [1, 1]} : vector<16x128xf32> to vector<16x32xf32>
    %cst_35 = arith.constant dense<0.000000e+00> : vector<16x16xf32>
    %104 = tpu.matmul %100, %101, %cst_35 {dimension_numbers = #tpu.dot_dimension_numbers<[1], [1], [0], [0], [0, 0, 1, 0], [], []>} : vector<16x32xf32>, vector<16x32xf32>, vector<16x16xf32> -> vector<16x16xf32>
    %cst_36 = arith.constant 0.176776692 : f32
    %105 = vector.broadcast %cst_36 : f32 to vector<16x16xf32>
    %106 = arith.mulf %105, %104 : vector<16x16xf32>
    %107 = arith.addf %106, %46 : vector<16x16xf32>
    %cst_37 = arith.constant dense<0xFF800000> : vector<16xf32>
    %108 = vector.multi_reduction <maximumf>, %107, %cst_37 [1] : vector<16x16xf32> to vector<16xf32>
    %109 = vector.shape_cast %108 : vector<16xf32> to vector<16x1xf32>
    %110 = vector.broadcast %109 : vector<16x1xf32> to vector<16x16xf32>
    %111 = arith.subf %107, %110 : vector<16x16xf32>
    %112 = math.exp %111 : vector<16x16xf32>
    %cst_38 = arith.constant dense<0.000000e+00> : vector<16xf32>
    %113 = vector.multi_reduction <add>, %112, %cst_38 [1] : vector<16x16xf32> to vector<16xf32>
    %114 = vector.shape_cast %113 : vector<16xf32> to vector<16x1xf32>
    %115 = tpu.reciprocal %114 {approx = true} : vector<16x1xf32> -> vector<16x1xf32>
    %116 = vector.broadcast %115 : vector<16x1xf32> to vector<16x16xf32>
    %117 = arith.mulf %112, %116 : vector<16x16xf32>
    %cst_39 = arith.constant dense<0.000000e+00> : vector<16x32xf32>
    %118 = tpu.matmul %117, %102, %cst_39 {dimension_numbers = #tpu.dot_dimension_numbers<[1], [0], [0], [1], [0, 0, 1, 1], [], []>} : vector<16x16xf32>, vector<16x32xf32>, vector<16x32xf32> -> vector<16x32xf32>
    %119 = arith.addf %103, %118 : vector<16x32xf32>
    %120 = arith.addf %119, %7 : vector<16x32xf32>
    %cst_40 = arith.constant 0.000000e+00 : f32
    %121 = vector.broadcast %cst_40 : f32 to vector<16x32xf32>
    %122 = arith.maximumf %120, %121 : vector<16x32xf32>
    %c0_41 = arith.constant 0 : index
    %c0_42 = arith.constant 0 : index
    %123 = vector.load %arg4[%c0_41, %c0_42] : memref<16x32xf32, #tpu.memory_space<vmem>>, vector<16x32xf32>
    tpu.vector_store %arg4[%c0_41, %c0_42], %122 {strides = array<i32>} : memref<16x32xf32, #tpu.memory_space<vmem>>, vector<16x32xf32>,
    return
  }
}

</mosaic_0001>

<llo_original>
// kernel: mpnn_fwd_pallas.1
$region0: #{mpnn_fwd_pallas.1}
  #allocation0 [shape = 'u32[]', space=smem, size = 0x4, offset = 0x4, fixed_abs, tag = 'smem constant byte address 0x4 - core index']
  #allocation1 [shape = 'u32[144,128]{1,0:T(1,128)}', space=vmem, size = 0x12000, scoped, tag = 'internal scratch']
  %s0 = inlined_call_operand.hbm [shape: f32[16,16], index: 0, kind: input, shape index: {}]
  %s1 = inlined_call_operand.hbm [shape: f32[16,32], index: 1, kind: input, shape index: {}]
  %s2 = inlined_call_operand.vmem [shape: f32[2,32], index: 2, kind: input, shape index: {}]
  %s3 = inlined_call_operand.hbm [shape: f32[32,128], index: 3, kind: input, shape index: {}]
  %s4 = inlined_call_operand.hbm [shape: f32[16,32], index: 4, kind: output, shape index: {}]
  %s5 = sld [smem:[#allocation0]]
  $region38: #{mpnn_fwd_pallas.1} parent=0
    _
  %s7 = ssub.s32 1, %s5
  %s8 = scalar_select 0, %s7, %s5
  $region1: #{mpnn_fwd_pallas.1} parent=0
    #allocation2 [shape = 'u8[8192]{0}', space=vmem, size = 0x2000, scoped, tag = 'input window, operand 0, single buffered']
    #allocation3 [shape = 's32[1]{0}', space=sflag, size = 0x4, scoped, tag = 'scoped memory for mpnn_fwd_pallas.1']
    #allocation4 [shape = 's32[1]{0}', space=sflag, size = 0x4, scoped, tag = 'scoped memory for mpnn_fwd_pallas.1']
    #allocation5 [shape = 'u8[8192]{0}', space=vmem, size = 0x2000, scoped, tag = 'input window, operand 1, single buffered']
    #allocation6 [shape = 's32[1]{0}', space=sflag, size = 0x4, scoped, tag = 'scoped memory for mpnn_fwd_pallas.1']
    #allocation7 [shape = 'u8[16384]{0}', space=vmem, size = 0x4000, scoped, tag = 'input window, operand 3, single buffered']
    #allocation8 [shape = 'u8[8192]{0}', space=vmem, size = 0x2000, scoped, tag = 'output window, operand 0, single buffered']
    %9 = vsyncpa [#allocation3], 0
    %10 = vsyncpa [#allocation6], 0
    %11 = vsyncpa [#allocation4], 0
    // Predicated region
    $region2: #{mpnn_fwd_pallas.1} parent=1 // pred_check
      _
    $region3: #{mpnn_fwd_pallas.1} parent=1 // pred_check_branch
      %13 = sbr.rel (0) target = $region5
    $region4: #{mpnn_fwd_pallas.1} parent=1 // pred_region
      %s15 = ssub.s32 256, 256
      %16 = vsyncadd [#allocation3], %s15
      %s17 = sshll.u32 [#allocation2], 4
      %s18 = int_to_ptr.vmem [resolvable:$true] %s17
      %23 = dma.hbm_to_vmem [thread:$0]  %s0, 256, %s18, [#allocation3], 128, 128, 8
    $region5: #{mpnn_fwd_pallas.1} parent=1 // pred_fallthru
      _
    // Predicated region
    $region6: #{mpnn_fwd_pallas.1} parent=1 // pred_check
      _
    $region7: #{mpnn_fwd_pallas.1} parent=1 // pred_check_branch
      %25 = sbr.rel (0) target = $region9
    $region8: #{mpnn_fwd_pallas.1} parent=1 // pred_region
      %s27 = ssub.s32 256, 256
      %28 = vsyncadd [#allocation6], %s27
      %s29 = sshll.u32 [#allocation5], 4
      %s30 = int_to_ptr.vmem [resolvable:$true] %s29
      %35 = dma.hbm_to_vmem [thread:$0]  %s1, 256, %s30, [#allocation6], 128, 128, 8
    $region9: #{mpnn_fwd_pallas.1} parent=1 // pred_fallthru
      _
    // Predicated region
    $region10: #{mpnn_fwd_pallas.1} parent=1 // pred_check
      _
    $region11: #{mpnn_fwd_pallas.1} parent=1 // pred_check_branch
      %37 = sbr.rel (0) target = $region13
    $region12: #{mpnn_fwd_pallas.1} parent=1 // pred_region
      _
    $region13: #{mpnn_fwd_pallas.1} parent=1 // pred_fallthru
      _
    // Predicated region
    $region14: #{mpnn_fwd_pallas.1} parent=1 // pred_check
      _
    $region15: #{mpnn_fwd_pallas.1} parent=1 // pred_check_branch
      %39 = sbr.rel (0) target = $region17
    $region16: #{mpnn_fwd_pallas.1} parent=1 // pred_region
      %s41 = ssub.s32 512, 512
      %42 = vsyncadd [#allocation6], %s41
      %s43 = sshll.u32 [#allocation7], 4
      %s44 = int_to_ptr.vmem [resolvable:$true] %s43
      %49 = dma.hbm_to_vmem [thread:$0]  %s3, 512, %s44, [#allocation6], 128, 128, 8
    $region17: #{mpnn_fwd_pallas.1} parent=1 // pred_fallthru
      _
    // Predicated region
    $region18: #{mpnn_fwd_pallas.1} parent=1 // pred_check
      _
    $region19: #{mpnn_fwd_pallas.1} parent=1 // pred_check_branch
      %51 = sbr.rel (0) target = $region21
    $region20: #{mpnn_fwd_pallas.1} parent=1 // pred_region
      %52 = dma.done [#allocation3], 256
    $region21: #{mpnn_fwd_pallas.1} parent=1 // pred_fallthru
      _
    // Predicated region
    $region22: #{mpnn_fwd_pallas.1} parent=1 // pred_check
      _
    $region23: #{mpnn_fwd_pallas.1} parent=1 // pred_check_branch
      %54 = sbr.rel (0) target = $region25
    $region24: #{mpnn_fwd_pallas.1} parent=1 // pred_region
      %55 = dma.done [#allocation6], 256
    $region25: #{mpnn_fwd_pallas.1} parent=1 // pred_fallthru
      _
    // Predicated region
    $region26: #{mpnn_fwd_pallas.1} parent=1 // pred_check
      _
    $region27: #{mpnn_fwd_pallas.1} parent=1 // pred_check_branch
      %57 = sbr.rel (0) target = $region29
    $region28: #{mpnn_fwd_pallas.1} parent=1 // pred_region
      %58 = dma.done [#allocation6], 512
    $region29: #{mpnn_fwd_pallas.1} parent=1 // pred_fallthru
      _
    %v59 = vld [vmem:[#allocation2] sm:$0xff]
    %v60 = vld [vmem:[#allocation2 + $0x8] sm:$0xff]
    %v61 = vld [vmem:[#allocation5] sm:$0xff]
    %v62 = vld [vmem:[#allocation5 + $0x8] sm:$0xff]
    %v63 = vld [vmem:[%s2] sm:$0x1]
    %v64 = vlaneseq
    %v65 = vshrl.u32 %v64, 7
    %v66 = vsub.s32 0, %v65
    %v67 = vrot.slane %v63, %v66
    %v68 = vld [vmem:[%s2 + $0x1] sm:$0x1]
    %v69 = vlaneseq
    %v70 = vshrl.u32 %v69, 7
    %v71 = vsub.s32 0, %v70
    %v72 = vrot.slane %v68, %v71
    %v73 = vld [vmem:[#allocation7] sm:$0xff]
    %v74 = vld [vmem:[#allocation7 + $0x8] sm:$0xff]
    %v75 = vld [vmem:[#allocation7 + $0x10] sm:$0xff]
    %v76 = vld [vmem:[#allocation7 + $0x18] sm:$0xff]
    %v77 = vlaneseq
    %v78 = vshrl.u32 %v77, 7
    %v79 = vadd.s32 %v78, 8
    %v80 = vlaneseq
    %v81 = vand.u32 %v80, 127
    %vm82 = vcmp.lt.s32.totalorder %v78, 0
    %v83 = vsub.s32 0, %v78
    %v84 = vsel %vm82, %v83, %v78
    %v85 = vshrl.u32 %v84, 1
    %v86 = vand.u32 %v84, 1
    %v87 = vsub.s32 0, %v86
    %v88 = vsel %vm82, %v87, %v86
    %vm89 = vcmp.lt.s32.totalorder %v79, 0
    %v90 = vsub.s32 0, %v79
    %v91 = vsel %vm89, %v90, %v79
    %v92 = vshrl.u32 %v91, 1
    %v93 = vand.u32 %v91, 1
    %v94 = vsub.s32 0, %v93
    %v95 = vsel %vm89, %v94, %v93
    %vm96 = vcmp.ne.s32.totalorder %v88, 0
    %vm97 = vcmp.ne.s32.totalorder %v95, 0
    %vm98 = vcmp.lt.s32.totalorder %v88, 0
    %vm99 = vcmp.lt.s32.totalorder %v95, 0
    %vm100 = vmand %vm98, %vm96
    %vm101 = vmand %vm99, %vm97
    %v102 = vadd.s32 %v88, 2
    %v103 = vadd.s32 %v95, 2
    %v104 = vsel %vm100, %v102, %v88
    %v105 = vsel %vm101, %v103, %v95
    %vm106 = vcmp.lt.s32.totalorder %v81, 0
    %v107 = vsub.s32 0, %v81
    %v108 = vsel %vm106, %v107, %v81
    %v109 = vshrl.u32 %v108, 1
    %v110 = vand.u32 %v108, 1
    %v111 = vsub.s32 0, %v110
    %v112 = vsel %vm106, %v111, %v110
    %vm113 = vcmp.ne.s32.totalorder %v112, 0
    %vm114 = vcmp.lt.s32.totalorder %v112, 0
    %vm115 = vmand %vm114, %vm113
    %v116 = vadd.s32 %v112, 2
    %v117 = vsel %vm115, %v116, %v112
    %vm118 = vcmp.eq.s32.totalorder %v104, %v117
    %vm119 = vcmp.eq.s32.totalorder %v105, %v117
    %v120 = vsel %vm118, 0.0, -1e+30
    %v121 = vsel %vm119, 0.0, -1e+30
    %vm122 = vcmask 130048
    %v124 = vsel %vm122, %v59, 0
    %v127 = vsel %vm122, %v60, 0
    %129 = vmatprep.subr.mxu0 0.0
    %130 = vmatpush1.msra.mxu0 %v61
    %131 = vmatprep.subr.mxu0 0.0
    %132 = vmatpush1.msra.mxu0 %v62
    %133 = vmatprep.subr.mxu0 0.0
    %134 = vmatpush1.msra.mxu0 0.0
    %135 = vmatprep.subr.mxu0 0.0
    %136 = vmatpush1.msra.mxu0 0.0
    %137 = vmatprep.subr.mxu0 0.0
    %138 = vmatpush1.msra.mxu0 0.0
    %139 = vmatprep.subr.mxu0 0.0
    %140 = vmatpush1.msra.mxu0 0.0
    %141 = vmatprep.subr.mxu0 0.0
    %142 = vmatpush1.msra.mxu0 0.0
    %143 = vmatprep.subr.mxu0 0.0
    %144 = vmatpush1.msra.mxu0 0.0
    %145 = vmatprep.subr.mxu0 0.0
    %146 = vmatpush1.msra.mxu0 0.0
    %147 = vmatprep.subr.mxu0 0.0
    %148 = vmatpush1.msra.mxu0 0.0
    %149 = vmatprep.subr.mxu0 0.0
    %150 = vmatpush1.msra.mxu0 0.0
    %151 = vmatprep.subr.mxu0 0.0
    %152 = vmatpush1.msra.mxu0 0.0
    %153 = vmatprep.subr.mxu0 0.0
    %154 = vmatpush1.msra.mxu0 0.0
    %155 = vmatprep.subr.mxu0 0.0
    %156 = vmatpush1.msra.mxu0 0.0
    %157 = vmatprep.subr.mxu0 0.0
    %158 = vmatpush1.msra.mxu0 0.0
    %159 = vmatprep.subr.mxu0 0.0
    %160 = vmatpush1.msra.mxu0 0.0
    %161 = vmatprep.subr.mxu0 0.0
    %162 = vmatpush1.msra.mxu0 0.0
    %163 = vmatprep.subr.mxu0 0.0
    %164 = vmatpush1.msra.mxu0 0.0
    %165 = vmatprep.subr.mxu0 0.0
    %166 = vmatpush1.msra.mxu0 0.0
    %167 = vmatprep.subr.mxu0 0.0
    %168 = vmatpush1.msra.mxu0 0.0
    %169 = vmatprep.subr.mxu0 0.0
    %170 = vmatpush1.msra.mxu0 0.0
    %171 = vmatprep.subr.mxu0 0.0
    %172 = vmatpush1.msra.mxu0 0.0
    %173 = vmatprep.subr.mxu0 0.0
    %174 = vmatpush1.msra.mxu0 0.0
    %175 = vmatprep.subr.mxu0 0.0
    %176 = vmatpush1.msra.mxu0 0.0
    %177 = vmatprep.subr.mxu0 0.0
    %178 = vmatpush1.msra.mxu0 0.0
    %179 = vmatprep.subr.mxu0 0.0
    %180 = vmatpush1.msra.mxu0 0.0
    %181 = vmatprep.subr.mxu0 0.0
    %182 = vmatpush1.msra.mxu0 0.0
    %183 = vmatprep.subr.mxu0 0.0
    %184 = vmatpush1.msra.mxu0 0.0
    %185 = vmatprep.subr.mxu0 0.0
    %186 = vmatpush1.msra.mxu0 0.0
    %187 = vmatprep.subr.mxu0 0.0
    %188 = vmatpush1.msra.mxu0 0.0
    %189 = vmatprep.subr.mxu0 0.0
    %190 = vmatpush1.msra.mxu0 0.0
    %191 = vmatprep.subr.mxu0 0.0
    %192 = vmatpush1.msra.mxu0 0.0
    %193 = vmatprep.mubr.f32.mxu0 0.0
    %194 = vmatmul.mubr.f32.gmra.mrb[0].mxu0 %v124
    %v195 = vpop.f32.mrb[0].mxu0
    %v196 = vadd.f32 %v67, %v195
    %v197 = vpop.f32.mrb[0].mxu0
    %198 = vmatprep.mubr.f32.mxu0 0.0
    %199 = vmatmul.mubr.f32.gmra.mrb[0].mxu0 %v127
    %v200 = vpop.f32.mrb[0].mxu0
    %v201 = vadd.f32 %v67, %v200
    %v202 = vpop.f32.mrb[0].mxu0
    %203 = vdwg.mxu0
    %v204 = vmax.f32 %v196, 0.0
    %v205 = vmax.f32 %v201, 0.0
    %vm206 = vcmask 261120
    %v208 = vsel %vm206, %v204, 0
    %v211 = vsel %vm206, %v205, 0
    %213 = vmatprep.subr.mxu0 0.0
    %214 = vmatpush1.msra.mxu0 %v73
    %215 = vmatprep.subr.mxu0 0.0
    %216 = vmatpush1.msra.mxu0 %v74
    %217 = vmatprep.subr.mxu0 0.0
    %218 = vmatpush1.msra.mxu0 %v75
    %219 = vmatprep.subr.mxu0 0.0
    %220 = vmatpush1.msra.mxu0 %v76
    %221 = vmatprep.subr.mxu0 0.0
    %222 = vmatpush1.msra.mxu0 0.0
    %223 = vmatprep.subr.mxu0 0.0
    %224 = vmatpush1.msra.mxu0 0.0
    %225 = vmatprep.subr.mxu0 0.0
    %226 = vmatpush1.msra.mxu0 0.0
    %227 = vmatprep.subr.mxu0 0.0
    %228 = vmatpush1.msra.mxu0 0.0
    %229 = vmatprep.subr.mxu0 0.0
    %230 = vmatpush1.msra.mxu0 0.0
    %231 = vmatprep.subr.mxu0 0.0
    %232 = vmatpush1.msra.mxu0 0.0
    %233 = vmatprep.subr.mxu0 0.0
    %234 = vmatpush1.msra.mxu0 0.0
    %235 = vmatprep.subr.mxu0 0.0
    %236 = vmatpush1.msra.mxu0 0.0
    %237 = vmatprep.subr.mxu0 0.0
    %238 = vmatpush1.msra.mxu0 0.0
    %239 = vmatprep.subr.mxu0 0.0
    %240 = vmatpush1.msra.mxu0 0.0
    %241 = vmatprep.subr.mxu0 0.0
    %242 = vmatpush1.msra.mxu0 0.0
    %243 = vmatprep.subr.mxu0 0.0
    %244 = vmatpush1.msra.mxu0 0.0
    %245 = vmatprep.subr.mxu0 0.0
    %246 = vmatpush1.msra.mxu0 0.0
    %247 = vmatprep.subr.mxu0 0.0
    %248 = vmatpush1.msra.mxu0 0.0
    %249 = vmatprep.subr.mxu0 0.0
    %250 = vmatpush1.msra.mxu0 0.0
    %251 = vmatprep.subr.mxu0 0.0
    %252 = vmatpush1.msra.mxu0 0.0
    %253 = vmatprep.subr.mxu0 0.0
    %254 = vmatpush1.msra.mxu0 0.0
    %255 = vmatprep.subr.mxu0 0.0
    %256 = vmatpush1.msra.mxu0 0.0
    %257 = vmatprep.subr.mxu0 0.0
    %258 = vmatpush1.msra.mxu0 0.0
    %259 = vmatprep.subr.mxu0 0.0
    %260 = vmatpush1.msra.mxu0 0.0
    %261 = vmatprep.subr.mxu0 0.0
    %262 = vmatpush1.msra.mxu0 0.0
    %263 = vmatprep.subr.mxu0 0.0
    %264 = vmatpush1.msra.mxu0 0.0
    %265 = vmatprep.subr.mxu0 0.0
    %266 = vmatpush1.msra.mxu0 0.0
    %267 = vmatprep.subr.mxu0 0.0
    %268 = vmatpush1.msra.mxu0 0.0
    %269 = vmatprep.subr.mxu0 0.0
    %270 = vmatpush1.msra.mxu0 0.0
    %271 = vmatprep.subr.mxu0 0.0
    %272 = vmatpush1.msra.mxu0 0.0
    %273 = vmatprep.subr.mxu0 0.0
    %274 = vmatpush1.msra.mxu0 0.0
    %275 = vmatprep.subr.mxu0 0.0
    %276 = vmatpush1.msra.mxu0 0.0
    %277 = vmatprep.mubr.f32.mxu0 0.0
    %278 = vmatmul.mubr.f32.gmra.mrb[0].mxu0 %v208
    %v279 = vpop.f32.mrb[0].mxu0
    %v280 = vadd.f32 0.0, %v279
    %v281 = vpop.f32.mrb[0].mxu0
    %282 = vmatprep.mubr.f32.mxu0 0.0
    %283 = vmatmul.mubr.f32.gmra.mrb[0].mxu0 %v211
    %v284 = vpop.f32.mrb[0].mxu0
    %v285 = vadd.f32 0.0, %v284
    %v286 = vpop.f32.mrb[0].mxu0
    %287 = vdwg.mxu0
    %290 = vrot.lane.b32.xlu0 %v280, 96
    %v291 = vpop.permute.xlu0 %290
    %292 = vrot.lane.b32.xlu0 %v285, 96
    %v293 = vpop.permute.xlu0 %292
    %v294 = vsel %vm206, %v280, 0
    %v296 = vsel %vm206, %v285, 0
    %v298 = vsel %vm206, %v291, 0
    %v300 = vsel %vm206, %v293, 0
    %302 = vmatprep.subr.mxu0 0.0
    %303 = vmatpush1.xpose.msra.mxu0 %v298
    %304 = vmatprep.subr.mxu0 0.0
    %305 = vmatpush1.xpose.msra.mxu0 %v300
    %306 = vmatprep.subr.mxu0 0.0
    %307 = vmatpush1.xpose.msra.mxu0 0.0
    %308 = vmatprep.subr.mxu0 0.0
    %309 = vmatpush1.xpose.msra.mxu0 0.0
    %310 = vmatprep.subr.mxu0 0.0
    %311 = vmatpush1.xpose.msra.mxu0 0.0
    %312 = vmatprep.subr.mxu0 0.0
    %313 = vmatpush1.xpose.msra.mxu0 0.0
    %314 = vmatprep.subr.mxu0 0.0
    %315 = vmatpush1.xpose.msra.mxu0 0.0
    %316 = vmatprep.subr.mxu0 0.0
    %317 = vmatpush1.xpose.msra.mxu0 0.0
    %318 = vmatprep.subr.mxu0 0.0
    %319 = vmatpush1.xpose.msra.mxu0 0.0
    %320 = vmatprep.subr.mxu0 0.0
    %321 = vmatpush1.xpose.msra.mxu0 0.0
    %322 = vmatprep.subr.mxu0 0.0
    %323 = vmatpush1.xpose.msra.mxu0 0.0
    %324 = vmatprep.subr.mxu0 0.0
    %325 = vmatpush1.xpose.msra.mxu0 0.0
    %326 = vmatprep.subr.mxu0 0.0
    %327 = vmatpush1.xpose.msra.mxu0 0.0
    %328 = vmatprep.subr.mxu0 0.0
    %329 = vmatpush1.xpose.msra.mxu0 0.0
    %330 = vmatprep.subr.mxu0 0.0
    %331 = vmatpush1.xpose.msra.mxu0 0.0
    %332 = vmatprep.subr.mxu0 0.0
    %333 = vmatpush1.xpose.msra.mxu0 0.0
    %334 = vmatprep.subr.mxu0 0.0
    %335 = vmatpush1.xpose.msra.mxu0 0.0
    %336 = vmatprep.subr.mxu0 0.0
    %337 = vmatpush1.xpose.msra.mxu0 0.0
    %338 = vmatprep.subr.mxu0 0.0
    %339 = vmatpush1.xpose.msra.mxu0 0.0
    %340 = vmatprep.subr.mxu0 0.0
    %341 = vmatpush1.xpose.msra.mxu0 0.0
    %342 = vmatprep.subr.mxu0 0.0
    %343 = vmatpush1.xpose.msra.mxu0 0.0
    %344 = vmatprep.subr.mxu0 0.0
    %345 = vmatpush1.xpose.msra.mxu0 0.0
    %346 = vmatprep.subr.mxu0 0.0
    %347 = vmatpush1.xpose.msra.mxu0 0.0
    %348 = vmatprep.subr.mxu0 0.0
    %349 = vmatpush1.xpose.msra.mxu0 0.0
    %350 = vmatprep.subr.mxu0 0.0
    %351 = vmatpush1.xpose.msra.mxu0 0.0
    %352 = vmatprep.subr.mxu0 0.0
    %353 = vmatpush1.xpose.msra.mxu0 0.0
    %354 = vmatprep.subr.mxu0 0.0
    %355 = vmatpush1.xpose.msra.mxu0 0.0
    %356 = vmatprep.subr.mxu0 0.0
    %357 = vmatpush1.xpose.msra.mxu0 0.0
    %358 = vmatprep.subr.mxu0 0.0
    %359 = vmatpush1.xpose.msra.mxu0 0.0
    %360 = vmatprep.subr.mxu0 0.0
    %361 = vmatpush1.xpose.msra.mxu0 0.0
    %362 = vmatprep.subr.mxu0 0.0
    %363 = vmatpush1.xpose.msra.mxu0 0.0
    %364 = vmatprep.subr.mxu0 0.0
    %365 = vmatpush1.xpose.msra.mxu0 0.0
    %366 = vmatprep.mubr.f32.mxu0 0.0
    %367 = vmatmul.mubr.f32.gmra.mrb[0].mxu0 %v294
    %v368 = vpop.f32.mrb[0].mxu0
    %v369 = vadd.f32 0.0, %v368
    %v370 = vpop.f32.mrb[0].mxu0
    %371 = vmatprep.mubr.f32.mxu0 0.0
    %372 = vmatmul.mubr.f32.gmra.mrb[0].mxu0 %v296
    %v373 = vpop.f32.mrb[0].mxu0
    %v374 = vadd.f32 0.0, %v373
    %v375 = vpop.f32.mrb[0].mxu0
    %376 = vdwg.mxu0
    %v377 = vmul.f32 %v369, 0.17677669
    %v378 = vmul.f32 %v374, 0.17677669
    %v379 = vadd.f32 %v377, %v120
    %v380 = vadd.f32 %v378, %v121
    %v381 = vsel %vm122, %v379, -inf
    %382 = vmax.xlane.f32.xlu0 %v381
    %v383 = vpop.xlane.xlu0 %382
    %v384 = vsel %vm122, %v380, -inf
    %385 = vmax.xlane.f32.xlu0 %v384
    %v386 = vpop.xlane.xlu0 %385
    %v387 = vsub.f32 %v379, %v383
    %v388 = vsub.f32 %v380, %v386
    %v389 = vmul.f32 %v387, 1.442695
    %v390 = vpow.pop %v389
    %v391 = vmul.f32 %v388, 1.442695
    %v392 = vpow.pop %v391
    %v393 = vsel %vm122, %v390, 0.0
    %394 = vadd.xlane.f32.xlu0 %v393
    %v395 = vpop.xlane.xlu0 %394
    %v396 = vsel %vm122, %v392, 0.0
    %397 = vadd.xlane.f32.xlu0 %v396
    %v398 = vpop.xlane.xlu0 %397
    %v399 = vrcp.pop %v395
    %v400 = vrcp.pop %v398
    %v401 = vmul.f32 %v390, %v399
    %v402 = vmul.f32 %v392, %v400
    %403 = vrot.lane.b32.xlu0 %v280, 64
    %v404 = vpop.permute.xlu0 %403
    %405 = vrot.lane.b32.xlu0 %v285, 64
    %v406 = vpop.permute.xlu0 %405
    %v410 = vsel %vm122, %v401, 0
    %v413 = vsel %vm122, %v402, 0
    %415 = vmatprep.subr.mxu0 0.0
    %416 = vmatpush1.msra.mxu0 %v404
    %417 = vmatprep.subr.mxu0 0.0
    %418 = vmatpush1.msra.mxu0 %v406
    %419 = vmatprep.subr.mxu0 0.0
    %420 = vmatpush1.msra.mxu0 0.0
    %421 = vmatprep.subr.mxu0 0.0
    %422 = vmatpush1.msra.mxu0 0.0
    %423 = vmatprep.subr.mxu0 0.0
    %424 = vmatpush1.msra.mxu0 0.0
    %425 = vmatprep.subr.mxu0 0.0
    %426 = vmatpush1.msra.mxu0 0.0
    %427 = vmatprep.subr.mxu0 0.0
    %428 = vmatpush1.msra.mxu0 0.0
    %429 = vmatprep.subr.mxu0 0.0
    %430 = vmatpush1.msra.mxu0 0.0
    %431 = vmatprep.subr.mxu0 0.0
    %432 = vmatpush1.msra.mxu0 0.0
    %433 = vmatprep.subr.mxu0 0.0
    %434 = vmatpush1.msra.mxu0 0.0
    %435 = vmatprep.subr.mxu0 0.0
    %436 = vmatpush1.msra.mxu0 0.0
    %437 = vmatprep.subr.mxu0 0.0
    %438 = vmatpush1.msra.mxu0 0.0
    %439 = vmatprep.subr.mxu0 0.0
    %440 = vmatpush1.msra.mxu0 0.0
    %441 = vmatprep.subr.mxu0 0.0
    %442 = vmatpush1.msra.mxu0 0.0
    %443 = vmatprep.subr.mxu0 0.0
    %444 = vmatpush1.msra.mxu0 0.0
    %445 = vmatprep.subr.mxu0 0.0
    %446 = vmatpush1.msra.mxu0 0.0
    %447 = vmatprep.subr.mxu0 0.0
    %448 = vmatpush1.msra.mxu0 0.0
    %449 = vmatprep.subr.mxu0 0.0
    %450 = vmatpush1.msra.mxu0 0.0
    %451 = vmatprep.subr.mxu0 0.0
    %452 = vmatpush1.msra.mxu0 0.0
    %453 = vmatprep.subr.mxu0 0.0
    %454 = vmatpush1.msra.mxu0 0.0
    %455 = vmatprep.subr.mxu0 0.0
    %456 = vmatpush1.msra.mxu0 0.0
    %457 = vmatprep.subr.mxu0 0.0
    %458 = vmatpush1.msra.mxu0 0.0
    %459 = vmatprep.subr.mxu0 0.0
    %460 = vmatpush1.msra.mxu0 0.0
    %461 = vmatprep.subr.mxu0 0.0
    %462 = vmatpush1.msra.mxu0 0.0
    %463 = vmatprep.subr.mxu0 0.0
    %464 = vmatpush1.msra.mxu0 0.0
    %465 = vmatprep.subr.mxu0 0.0
    %466 = vmatpush1.msra.mxu0 0.0
    %467 = vmatprep.subr.mxu0 0.0
    %468 = vmatpush1.msra.mxu0 0.0
    %469 = vmatprep.subr.mxu0 0.0
    %470 = vmatpush1.msra.mxu0 0.0
    %471 = vmatprep.subr.mxu0 0.0
    %472 = vmatpush1.msra.mxu0 0.0
    %473 = vmatprep.subr.mxu0 0.0
    %474 = vmatpush1.msra.mxu0 0.0
    %475 = vmatprep.subr.mxu0 0.0
    %476 = vmatpush1.msra.mxu0 0.0
    %477 = vmatprep.subr.mxu0 0.0
    %478 = vmatpush1.msra.mxu0 0.0
    %479 = vmatprep.mubr.f32.mxu0 0.0
    %480 = vmatmul.mubr.f32.gmra.mrb[0].mxu0 %v410
    %v481 = vpop.f32.mrb[0].mxu0
    %v482 = vadd.f32 0.0, %v481
    %v483 = vpop.f32.mrb[0].mxu0
    %484 = vmatprep.mubr.f32.mxu0 0.0
    %485 = vmatmul.mubr.f32.gmra.mrb[0].mxu0 %v413
    %v486 = vpop.f32.mrb[0].mxu0
    %v487 = vadd.f32 0.0, %v486
    %v488 = vpop.f32.mrb[0].mxu0
    %489 = vdwg.mxu0
    %492 = vrot.lane.b32.xlu0 %v482, 96
    %v493 = vpop.permute.xlu0 %492
    %494 = vrot.lane.b32.xlu0 %v487, 96
    %v495 = vpop.permute.xlu0 %494
    %v498 = vadd.f32 %v280, %v493
    %v499 = vadd.f32 %v285, %v495
    %501 = vrot.lane.b32.xlu0 %v72, 96
    %v502 = vpop.permute.xlu0 %501
    %v504 = vadd.f32 %v498, %v502
    %v505 = vadd.f32 %v499, %v502
    %v506 = vmax.f32 %v504, 0.0
    %v507 = vmax.f32 %v505, 0.0
    %510 = vrot.lane.b32.xlu0 %v506, 32
    %v511 = vpop.permute.xlu0 %510
    %512 = vrot.lane.b32.xlu0 %v507, 32
    %v513 = vpop.permute.xlu0 %512
    %v514 = vsel %vm206, %v511, 0
    %v516 = vsel %vm206, %v513, 0
    %518 = vmatprep.subr.mxu0 0.0
    %519 = vmatpush1.msra.mxu0 %v73
    %520 = vmatprep.subr.mxu0 0.0
    %521 = vmatpush1.msra.mxu0 %v74
    %522 = vmatprep.subr.mxu0 0.0
    %523 = vmatpush1.msra.mxu0 %v75
    %524 = vmatprep.subr.mxu0 0.0
    %525 = vmatpush1.msra.mxu0 %v76
    %526 = vmatprep.subr.mxu0 0.0
    %527 = vmatpush1.msra.mxu0 0.0
    %528 = vmatprep.subr.mxu0 0.0
    %529 = vmatpush1.msra.mxu0 0.0
    %530 = vmatprep.subr.mxu0 0.0
    %531 = vmatpush1.msra.mxu0 0.0
    %532 = vmatprep.subr.mxu0 0.0
    %533 = vmatpush1.msra.mxu0 0.0
    %534 = vmatprep.subr.mxu0 0.0
    %535 = vmatpush1.msra.mxu0 0.0
    %536 = vmatprep.subr.mxu0 0.0
    %537 = vmatpush1.msra.mxu0 0.0
    %538 = vmatprep.subr.mxu0 0.0
    %539 = vmatpush1.msra.mxu0 0.0
    %540 = vmatprep.subr.mxu0 0.0
    %541 = vmatpush1.msra.mxu0 0.0
    %542 = vmatprep.subr.mxu0 0.0
    %543 = vmatpush1.msra.mxu0 0.0
    %544 = vmatprep.subr.mxu0 0.0
    %545 = vmatpush1.msra.mxu0 0.0
    %546 = vmatprep.subr.mxu0 0.0
    %547 = vmatpush1.msra.mxu0 0.0
    %548 = vmatprep.subr.mxu0 0.0
    %549 = vmatpush1.msra.mxu0 0.0
    %550 = vmatprep.subr.mxu0 0.0
    %551 = vmatpush1.msra.mxu0 0.0
    %552 = vmatprep.subr.mxu0 0.0
    %553 = vmatpush1.msra.mxu0 0.0
    %554 = vmatprep.subr.mxu0 0.0
    %555 = vmatpush1.msra.mxu0 0.0
    %556 = vmatprep.subr.mxu0 0.0
    %557 = vmatpush1.msra.mxu0 0.0
    %558 = vmatprep.subr.mxu0 0.0
    %559 = vmatpush1.msra.mxu0 0.0
    %560 = vmatprep.subr.mxu0 0.0
    %561 = vmatpush1.msra.mxu0 0.0
    %562 = vmatprep.subr.mxu0 0.0
    %563 = vmatpush1.msra.mxu0 0.0
    %564 = vmatprep.subr.mxu0 0.0
    %565 = vmatpush1.msra.mxu0 0.0
    %566 = vmatprep.subr.mxu0 0.0
    %567 = vmatpush1.msra.mxu0 0.0
    %568 = vmatprep.subr.mxu0 0.0
    %569 = vmatpush1.msra.mxu0 0.0
    %570 = vmatprep.subr.mxu0 0.0
    %571 = vmatpush1.msra.mxu0 0.0
    %572 = vmatprep.subr.mxu0 0.0
    %573 = vmatpush1.msra.mxu0 0.0
    %574 = vmatprep.subr.mxu0 0.0
    %575 = vmatpush1.msra.mxu0 0.0
    %576 = vmatprep.subr.mxu0 0.0
    %577 = vmatpush1.msra.mxu0 0.0
    %578 = vmatprep.subr.mxu0 0.0
    %579 = vmatpush1.msra.mxu0 0.0
    %580 = vmatprep.subr.mxu0 0.0
    %581 = vmatpush1.msra.mxu0 0.0
    %582 = vmatprep.mubr.f32.mxu0 0.0
    %583 = vmatmul.mubr.f32.gmra.mrb[0].mxu0 %v514
    %v584 = vpop.f32.mrb[0].mxu0
    %v585 = vadd.f32 0.0, %v584
    %v586 = vpop.f32.mrb[0].mxu0
    %587 = vmatprep.mubr.f32.mxu0 0.0
    %588 = vmatmul.mubr.f32.gmra.mrb[0].mxu0 %v516
    %v589 = vpop.f32.mrb[0].mxu0
    %v590 = vadd.f32 0.0, %v589
    %v591 = vpop.f32.mrb[0].mxu0
    %592 = vdwg.mxu0
    %595 = vrot.lane.b32.xlu0 %v585, 96
    %v596 = vpop.permute.xlu0 %595
    %597 = vrot.lane.b32.xlu0 %v590, 96
    %v598 = vpop.permute.xlu0 %597
    %v599 = vsel %vm206, %v585, 0
    %v601 = vsel %vm206, %v590, 0
    %v603 = vsel %vm206, %v596, 0
    %v605 = vsel %vm206, %v598, 0
    %607 = vmatprep.subr.mxu0 0.0
    %608 = vmatpush1.xpose.msra.mxu0 %v603
    %609 = vmatprep.subr.mxu0 0.0
    %610 = vmatpush1.xpose.msra.mxu0 %v605
    %611 = vmatprep.subr.mxu0 0.0
    %612 = vmatpush1.xpose.msra.mxu0 0.0
    %613 = vmatprep.subr.mxu0 0.0
    %614 = vmatpush1.xpose.msra.mxu0 0.0
    %615 = vmatprep.subr.mxu0 0.0
    %616 = vmatpush1.xpose.msra.mxu0 0.0
    %617 = vmatprep.subr.mxu0 0.0
    %618 = vmatpush1.xpose.msra.mxu0 0.0
    %619 = vmatprep.subr.mxu0 0.0
    %620 = vmatpush1.xpose.msra.mxu0 0.0
    %621 = vmatprep.subr.mxu0 0.0
    %622 = vmatpush1.xpose.msra.mxu0 0.0
    %623 = vmatprep.subr.mxu0 0.0
    %624 = vmatpush1.xpose.msra.mxu0 0.0
    %625 = vmatprep.subr.mxu0 0.0
    %626 = vmatpush1.xpose.msra.mxu0 0.0
    %627 = vmatprep.subr.mxu0 0.0
    %628 = vmatpush1.xpose.msra.mxu0 0.0
    %629 = vmatprep.subr.mxu0 0.0
    %630 = vmatpush1.xpose.msra.mxu0 0.0
    %631 = vmatprep.subr.mxu0 0.0
    %632 = vmatpush1.xpose.msra.mxu0 0.0
    %633 = vmatprep.subr.mxu0 0.0
    %634 = vmatpush1.xpose.msra.mxu0 0.0
    %635 = vmatprep.subr.mxu0 0.0
    %636 = vmatpush1.xpose.msra.mxu0 0.0
    %637 = vmatprep.subr.mxu0 0.0
    %638 = vmatpush1.xpose.msra.mxu0 0.0
    %639 = vmatprep.subr.mxu0 0.0
    %640 = vmatpush1.xpose.msra.mxu0 0.0
    %641 = vmatprep.subr.mxu0 0.0
    %642 = vmatpush1.xpose.msra.mxu0 0.0
    %643 = vmatprep.subr.mxu0 0.0
    %644 = vmatpush1.xpose.msra.mxu0 0.0
    %645 = vmatprep.subr.mxu0 0.0
    %646 = vmatpush1.xpose.msra.mxu0 0.0
    %647 = vmatprep.subr.mxu0 0.0
    %648 = vmatpush1.xpose.msra.mxu0 0.0
    %649 = vmatprep.subr.mxu0 0.0
    %650 = vmatpush1.xpose.msra.mxu0 0.0
    %651 = vmatprep.subr.mxu0 0.0
    %652 = vmatpush1.xpose.msra.mxu0 0.0
    %653 = vmatprep.subr.mxu0 0.0
    %654 = vmatpush1.xpose.msra.mxu0 0.0
    %655 = vmatprep.subr.mxu0 0.0
    %656 = vmatpush1.xpose.msra.mxu0 0.0
    %657 = vmatprep.subr.mxu0 0.0
    %658 = vmatpush1.xpose.msra.mxu0 0.0
    %659 = vmatprep.subr.mxu0 0.0
    %660 = vmatpush1.xpose.msra.mxu0 0.0
    %661 = vmatprep.subr.mxu0 0.0
    %662 = vmatpush1.xpose.msra.mxu0 0.0
    %663 = vmatprep.subr.mxu0 0.0
    %664 = vmatpush1.xpose.msra.mxu0 0.0
    %665 = vmatprep.subr.mxu0 0.0
    %666 = vmatpush1.xpose.msra.mxu0 0.0
    %667 = vmatprep.subr.mxu0 0.0
    %668 = vmatpush1.xpose.msra.mxu0 0.0
    %669 = vmatprep.subr.mxu0 0.0
    %670 = vmatpush1.xpose.msra.mxu0 0.0
    %671 = vmatprep.mubr.f32.mxu0 0.0
    %672 = vmatmul.mubr.f32.gmra.mrb[0].mxu0 %v599
    %v673 = vpop.f32.mrb[0].mxu0
    %v674 = vadd.f32 0.0, %v673
    %v675 = vpop.f32.mrb[0].mxu0
    %676 = vmatprep.mubr.f32.mxu0 0.0
    %677 = vmatmul.mubr.f32.gmra.mrb[0].mxu0 %v601
    %v678 = vpop.f32.mrb[0].mxu0
    %v679 = vadd.f32 0.0, %v678
    %v680 = vpop.f32.mrb[0].mxu0
    %681 = vdwg.mxu0
    %v682 = vmul.f32 %v674, 0.17677669
    %v683 = vmul.f32 %v679, 0.17677669
    %v684 = vadd.f32 %v682, %v120
    %v685 = vadd.f32 %v683, %v121
    %v686 = vsel %vm122, %v684, -inf
    %687 = vmax.xlane.f32.xlu0 %v686
    %v688 = vpop.xlane.xlu0 %687
    %v689 = vsel %vm122, %v685, -inf
    %690 = vmax.xlane.f32.xlu0 %v689
    %v691 = vpop.xlane.xlu0 %690
    %v692 = vsub.f32 %v684, %v688
    %v693 = vsub.f32 %v685, %v691
    %v694 = vmul.f32 %v692, 1.442695
    %v695 = vpow.pop %v694
    %v696 = vmul.f32 %v693, 1.442695
    %v697 = vpow.pop %v696
    %v698 = vsel %vm122, %v695, 0.0
    %699 = vadd.xlane.f32.xlu0 %v698
    %v700 = vpop.xlane.xlu0 %699
    %v701 = vsel %vm122, %v697, 0.0
    %702 = vadd.xlane.f32.xlu0 %v701
    %v703 = vpop.xlane.xlu0 %702
    %v704 = vrcp.pop %v700
    %v705 = vrcp.pop %v703
    %v706 = vmul.f32 %v695, %v704
    %v707 = vmul.f32 %v697, %v705
    %708 = vrot.lane.b32.xlu0 %v585, 64
    %v709 = vpop.permute.xlu0 %708
    %710 = vrot.lane.b32.xlu0 %v590, 64
    %v711 = vpop.permute.xlu0 %710
    %v715 = vsel %vm122, %v706, 0
    %v718 = vsel %vm122, %v707, 0
    %720 = vmatprep.subr.mxu0 0.0
    %721 = vmatpush1.msra.mxu0 %v709
    %722 = vmatprep.subr.mxu0 0.0
    %723 = vmatpush1.msra.mxu0 %v711
    %724 = vmatprep.subr.mxu0 0.0
    %725 = vmatpush1.msra.mxu0 0.0
    %726 = vmatprep.subr.mxu0 0.0
    %727 = vmatpush1.msra.mxu0 0.0
    %728 = vmatprep.subr.mxu0 0.0
    %729 = vmatpush1.msra.mxu0 0.0
    %730 = vmatprep.subr.mxu0 0.0
    %731 = vmatpush1.msra.mxu0 0.0
    %732 = vmatprep.subr.mxu0 0.0
    %733 = vmatpush1.msra.mxu0 0.0
    %734 = vmatprep.subr.mxu0 0.0
    %735 = vmatpush1.msra.mxu0 0.0
    %736 = vmatprep.subr.mxu0 0.0
    %737 = vmatpush1.msra.mxu0 0.0
    %738 = vmatprep.subr.mxu0 0.0
    %739 = vmatpush1.msra.mxu0 0.0
    %740 = vmatprep.subr.mxu0 0.0
    %741 = vmatpush1.msra.mxu0 0.0
    %742 = vmatprep.subr.mxu0 0.0
    %743 = vmatpush1.msra.mxu0 0.0
    %744 = vmatprep.subr.mxu0 0.0
    %745 = vmatpush1.msra.mxu0 0.0
    %746 = vmatprep.subr.mxu0 0.0
    %747 = vmatpush1.msra.mxu0 0.0
    %748 = vmatprep.subr.mxu0 0.0
    %749 = vmatpush1.msra.mxu0 0.0
    %750 = vmatprep.subr.mxu0 0.0
    %751 = vmatpush1.msra.mxu0 0.0
    %752 = vmatprep.subr.mxu0 0.0
    %753 = vmatpush1.msra.mxu0 0.0
    %754 = vmatprep.subr.mxu0 0.0
    %755 = vmatpush1.msra.mxu0 0.0
    %756 = vmatprep.subr.mxu0 0.0
    %757 = vmatpush1.msra.mxu0 0.0
    %758 = vmatprep.subr.mxu0 0.0
    %759 = vmatpush1.msra.mxu0 0.0
    %760 = vmatprep.subr.mxu0 0.0
    %761 = vmatpush1.msra.mxu0 0.0
    %762 = vmatprep.subr.mxu0 0.0
    %763 = vmatpush1.msra.mxu0 0.0
    %764 = vmatprep.subr.mxu0 0.0
    %765 = vmatpush1.msra.mxu0 0.0
    %766 = vmatprep.subr.mxu0 0.0
    %767 = vmatpush1.msra.mxu0 0.0
    %768 = vmatprep.subr.mxu0 0.0
    %769 = vmatpush1.msra.mxu0 0.0
    %770 = vmatprep.subr.mxu0 0.0
    %771 = vmatpush1.msra.mxu0 0.0
    %772 = vmatprep.subr.mxu0 0.0
    %773 = vmatpush1.msra.mxu0 0.0
    %774 = vmatprep.subr.mxu0 0.0
    %775 = vmatpush1.msra.mxu0 0.0
    %776 = vmatprep.subr.mxu0 0.0
    %777 = vmatpush1.msra.mxu0 0.0
    %778 = vmatprep.subr.mxu0 0.0
    %779 = vmatpush1.msra.mxu0 0.0
    %780 = vmatprep.subr.mxu0 0.0
    %781 = vmatpush1.msra.mxu0 0.0
    %782 = vmatprep.subr.mxu0 0.0
    %783 = vmatpush1.msra.mxu0 0.0
    %784 = vmatprep.mubr.f32.mxu0 0.0
    %785 = vmatmul.mubr.f32.gmra.mrb[0].mxu0 %v715
    %v786 = vpop.f32.mrb[0].mxu0
    %v787 = vadd.f32 0.0, %v786
    %v788 = vpop.f32.mrb[0].mxu0
    %789 = vmatprep.mubr.f32.mxu0 0.0
    %790 = vmatmul.mubr.f32.gmra.mrb[0].mxu0 %v718
    %v791 = vpop.f32.mrb[0].mxu0
    %v792 = vadd.f32 0.0, %v791
    %v793 = vpop.f32.mrb[0].mxu0
    %794 = vdwg.mxu0
    %797 = vrot.lane.b32.xlu0 %v787, 96
    %v798 = vpop.permute.xlu0 %797
    %799 = vrot.lane.b32.xlu0 %v792, 96
    %v800 = vpop.permute.xlu0 %799
    %v803 = vadd.f32 %v585, %v798
    %v804 = vadd.f32 %v590, %v800
    %v805 = vadd.f32 %v803, %v502
    %v806 = vadd.f32 %v804, %v502
    %v807 = vmax.f32 %v805, 0.0
    %v808 = vmax.f32 %v806, 0.0
    %811 = vrot.lane.b32.xlu0 %v807, 32
    %v812 = vpop.permute.xlu0 %811
    %813 = vrot.lane.b32.xlu0 %v808, 32
    %v814 = vpop.permute.xlu0 %813
    %v815 = vsel %vm206, %v812, 0
    %v817 = vsel %vm206, %v814, 0
    %819 = vmatprep.subr.mxu0 0.0
    %820 = vmatpush1.msra.mxu0 %v73
    %821 = vmatprep.subr.mxu0 0.0
    %822 = vmatpush1.msra.mxu0 %v74
    %823 = vmatprep.subr.mxu0 0.0
    %824 = vmatpush1.msra.mxu0 %v75
    %825 = vmatprep.subr.mxu0 0.0
    %826 = vmatpush1.msra.mxu0 %v76
    %827 = vmatprep.subr.mxu0 0.0
    %828 = vmatpush1.msra.mxu0 0.0
    %829 = vmatprep.subr.mxu0 0.0
    %830 = vmatpush1.msra.mxu0 0.0
    %831 = vmatprep.subr.mxu0 0.0
    %832 = vmatpush1.msra.mxu0 0.0
    %833 = vmatprep.subr.mxu0 0.0
    %834 = vmatpush1.msra.mxu0 0.0
    %835 = vmatprep.subr.mxu0 0.0
    %836 = vmatpush1.msra.mxu0 0.0
    %837 = vmatprep.subr.mxu0 0.0
    %838 = vmatpush1.msra.mxu0 0.0
    %839 = vmatprep.subr.mxu0 0.0
    %840 = vmatpush1.msra.mxu0 0.0
    %841 = vmatprep.subr.mxu0 0.0
    %842 = vmatpush1.msra.mxu0 0.0
    %843 = vmatprep.subr.mxu0 0.0
    %844 = vmatpush1.msra.mxu0 0.0
    %845 = vmatprep.subr.mxu0 0.0
    %846 = vmatpush1.msra.mxu0 0.0
    %847 = vmatprep.subr.mxu0 0.0
    %848 = vmatpush1.msra.mxu0 0.0
    %849 = vmatprep.subr.mxu0 0.0
    %850 = vmatpush1.msra.mxu0 0.0
    %851 = vmatprep.subr.mxu0 0.0
    %852 = vmatpush1.msra.mxu0 0.0
    %853 = vmatprep.subr.mxu0 0.0
    %854 = vmatpush1.msra.mxu0 0.0
    %855 = vmatprep.subr.mxu0 0.0
    %856 = vmatpush1.msra.mxu0 0.0
    %857 = vmatprep.subr.mxu0 0.0
    %858 = vmatpush1.msra.mxu0 0.0
    %859 = vmatprep.subr.mxu0 0.0
    %860 = vmatpush1.msra.mxu0 0.0
    %861 = vmatprep.subr.mxu0 0.0
    %862 = vmatpush1.msra.mxu0 0.0
    %863 = vmatprep.subr.mxu0 0.0
    %864 = vmatpush1.msra.mxu0 0.0
    %865 = vmatprep.subr.mxu0 0.0
    %866 = vmatpush1.msra.mxu0 0.0
    %867 = vmatprep.subr.mxu0 0.0
    %868 = vmatpush1.msra.mxu0 0.0
    %869 = vmatprep.subr.mxu0 0.0
    %870 = vmatpush1.msra.mxu0 0.0
    %871 = vmatprep.subr.mxu0 0.0
    %872 = vmatpush1.msra.mxu0 0.0
    %873 = vmatprep.subr.mxu0 0.0
    %874 = vmatpush1.msra.mxu0 0.0
    %875 = vmatprep.subr.mxu0 0.0
    %876 = vmatpush1.msra.mxu0 0.0
    %877 = vmatprep.subr.mxu0 0.0
    %878 = vmatpush1.msra.mxu0 0.0
    %879 = vmatprep.subr.mxu0 0.0
    %880 = vmatpush1.msra.mxu0 0.0
    %881 = vmatprep.subr.mxu0 0.0
    %882 = vmatpush1.msra.mxu0 0.0
    %883 = vmatprep.mubr.f32.mxu0 0.0
    %884 = vmatmul.mubr.f32.gmra.mrb[0].mxu0 %v815
    %v885 = vpop.f32.mrb[0].mxu0
    %v886 = vadd.f32 0.0, %v885
    %v887 = vpop.f32.mrb[0].mxu0
    %888 = vmatprep.mubr.f32.mxu0 0.0
    %889 = vmatmul.mubr.f32.gmra.mrb[0].mxu0 %v817
    %v890 = vpop.f32.mrb[0].mxu0
    %v891 = vadd.f32 0.0, %v890
    %v892 = vpop.f32.mrb[0].mxu0
    %893 = vdwg.mxu0
    %896 = vrot.lane.b32.xlu0 %v886, 96
    %v897 = vpop.permute.xlu0 %896
    %898 = vrot.lane.b32.xlu0 %v891, 96
    %v899 = vpop.permute.xlu0 %898
    %v900 = vsel %vm206, %v886, 0
    %v902 = vsel %vm206, %v891, 0
    %v904 = vsel %vm206, %v897, 0
    %v906 = vsel %vm206, %v899, 0
    %908 = vmatprep.subr.mxu0 0.0
    %909 = vmatpush1.xpose.msra.mxu0 %v904
    %910 = vmatprep.subr.mxu0 0.0
    %911 = vmatpush1.xpose.msra.mxu0 %v906
    %912 = vmatprep.subr.mxu0 0.0
    %913 = vmatpush1.xpose.msra.mxu0 0.0
    %914 = vmatprep.subr.mxu0 0.0
    %915 = vmatpush1.xpose.msra.mxu0 0.0
    %916 = vmatprep.subr.mxu0 0.0
    %917 = vmatpush1.xpose.msra.mxu0 0.0
    %918 = vmatprep.subr.mxu0 0.0
    %919 = vmatpush1.xpose.msra.mxu0 0.0
    %920 = vmatprep.subr.mxu0 0.0
    %921 = vmatpush1.xpose.msra.mxu0 0.0
    %922 = vmatprep.subr.mxu0 0.0
    %923 = vmatpush1.xpose.msra.mxu0 0.0
    %924 = vmatprep.subr.mxu0 0.0
    %925 = vmatpush1.xpose.msra.mxu0 0.0
    %926 = vmatprep.subr.mxu0 0.0
    %927 = vmatpush1.xpose.msra.mxu0 0.0
    %928 = vmatprep.subr.mxu0 0.0
    %929 = vmatpush1.xpose.msra.mxu0 0.0
    %930 = vmatprep.subr.mxu0 0.0
    %931 = vmatpush1.xpose.msra.mxu0 0.0
    %932 = vmatprep.subr.mxu0 0.0
    %933 = vmatpush1.xpose.msra.mxu0 0.0
    %934 = vmatprep.subr.mxu0 0.0
    %935 = vmatpush1.xpose.msra.mxu0 0.0
    %936 = vmatprep.subr.mxu0 0.0
    %937 = vmatpush1.xpose.msra.mxu0 0.0
    %938 = vmatprep.subr.mxu0 0.0
    %939 = vmatpush1.xpose.msra.mxu0 0.0
    %940 = vmatprep.subr.mxu0 0.0
    %941 = vmatpush1.xpose.msra.mxu0 0.0
    %942 = vmatprep.subr.mxu0 0.0
    %943 = vmatpush1.xpose.msra.mxu0 0.0
    %944 = vmatprep.subr.mxu0 0.0
    %945 = vmatpush1.xpose.msra.mxu0 0.0
    %946 = vmatprep.subr.mxu0 0.0
    %947 = vmatpush1.xpose.msra.mxu0 0.0
    %948 = vmatprep.subr.mxu0 0.0
    %949 = vmatpush1.xpose.msra.mxu0 0.0
    %950 = vmatprep.subr.mxu0 0.0
    %951 = vmatpush1.xpose.msra.mxu0 0.0
    %952 = vmatprep.subr.mxu0 0.0
    %953 = vmatpush1.xpose.msra.mxu0 0.0
    %954 = vmatprep.subr.mxu0 0.0
    %955 = vmatpush1.xpose.msra.mxu0 0.0
    %956 = vmatprep.subr.mxu0 0.0
    %957 = vmatpush1.xpose.msra.mxu0 0.0
    %958 = vmatprep.subr.mxu0 0.0
    %959 = vmatpush1.xpose.msra.mxu0 0.0
    %960 = vmatprep.subr.mxu0 0.0
    %961 = vmatpush1.xpose.msra.mxu0 0.0
    %962 = vmatprep.subr.mxu0 0.0
    %963 = vmatpush1.xpose.msra.mxu0 0.0
    %964 = vmatprep.subr.mxu0 0.0
    %965 = vmatpush1.xpose.msra.mxu0 0.0
    %966 = vmatprep.subr.mxu0 0.0
    %967 = vmatpush1.xpose.msra.mxu0 0.0
    %968 = vmatprep.subr.mxu0 0.0
    %969 = vmatpush1.xpose.msra.mxu0 0.0
    %970 = vmatprep.subr.mxu0 0.0
    %971 = vmatpush1.xpose.msra.mxu0 0.0
    %972 = vmatprep.mubr.f32.mxu0 0.0
    %973 = vmatmul.mubr.f32.gmra.mrb[0].mxu0 %v900
    %v974 = vpop.f32.mrb[0].mxu0
    %v975 = vadd.f32 0.0, %v974
    %v976 = vpop.f32.mrb[0].mxu0
    %977 = vmatprep.mubr.f32.mxu0 0.0
    %978 = vmatmul.mubr.f32.gmra.mrb[0].mxu0 %v902
    %v979 = vpop.f32.mrb[0].mxu0
    %v980 = vadd.f32 0.0, %v979
    %v981 = vpop.f32.mrb[0].mxu0
    %982 = vdwg.mxu0
    %v983 = vmul.f32 %v975, 0.17677669
    %v984 = vmul.f32 %v980, 0.17677669
    %v985 = vadd.f32 %v983, %v120
    %v986 = vadd.f32 %v984, %v121
    %v987 = vsel %vm122, %v985, -inf
    %988 = vmax.xlane.f32.xlu0 %v987
    %v989 = vpop.xlane.xlu0 %988
    %v990 = vsel %vm122, %v986, -inf
    %991 = vmax.xlane.f32.xlu0 %v990
    %v992 = vpop.xlane.xlu0 %991
    %v993 = vsub.f32 %v985, %v989
    %v994 = vsub.f32 %v986, %v992
    %v995 = vmul.f32 %v993, 1.442695
    %v996 = vpow.pop %v995
    %v997 = vmul.f32 %v994, 1.442695
    %v998 = vpow.pop %v997
    %v999 = vsel %vm122, %v996, 0.0
    %1000 = vadd.xlane.f32.xlu0 %v999
    %v1001 = vpop.xlane.xlu0 %1000
    %v1002 = vsel %vm122, %v998, 0.0
    %1003 = vadd.xlane.f32.xlu0 %v1002
    %v1004 = vpop.xlane.xlu0 %1003
    %v1005 = vrcp.pop %v1001
    %v1006 = vrcp.pop %v1004
    %v1007 = vmul.f32 %v996, %v1005
    %v1008 = vmul.f32 %v998, %v1006
    %1009 = vrot.lane.b32.xlu0 %v886, 64
    %v1010 = vpop.permute.xlu0 %1009
    %1011 = vrot.lane.b32.xlu0 %v891, 64
    %v1012 = vpop.permute.xlu0 %1011
    %v1016 = vsel %vm122, %v1007, 0
    %v1019 = vsel %vm122, %v1008, 0
    %1021 = vmatprep.subr.mxu0 0.0
    %1022 = vmatpush1.msra.mxu0 %v1010
    %1023 = vmatprep.subr.mxu0 0.0
    %1024 = vmatpush1.msra.mxu0 %v1012
    %1025 = vmatprep.subr.mxu0 0.0
    %1026 = vmatpush1.msra.mxu0 0.0
    %1027 = vmatprep.subr.mxu0 0.0
    %1028 = vmatpush1.msra.mxu0 0.0
    %1029 = vmatprep.subr.mxu0 0.0
    %1030 = vmatpush1.msra.mxu0 0.0
    %1031 = vmatprep.subr.mxu0 0.0
    %1032 = vmatpush1.msra.mxu0 0.0
    %1033 = vmatprep.subr.mxu0 0.0
    %1034 = vmatpush1.msra.mxu0 0.0
    %1035 = vmatprep.subr.mxu0 0.0
    %1036 = vmatpush1.msra.mxu0 0.0
    %1037 = vmatprep.subr.mxu0 0.0
    %1038 = vmatpush1.msra.mxu0 0.0
    %1039 = vmatprep.subr.mxu0 0.0
    %1040 = vmatpush1.msra.mxu0 0.0
    %1041 = vmatprep.subr.mxu0 0.0
    %1042 = vmatpush1.msra.mxu0 0.0
    %1043 = vmatprep.subr.mxu0 0.0
    %1044 = vmatpush1.msra.mxu0 0.0
    %1045 = vmatprep.subr.mxu0 0.0
    %1046 = vmatpush1.msra.mxu0 0.0
    %1047 = vmatprep.subr.mxu0 0.0
    %1048 = vmatpush1.msra.mxu0 0.0
    %1049 = vmatprep.subr.mxu0 0.0
    %1050 = vmatpush1.msra.mxu0 0.0
    %1051 = vmatprep.subr.mxu0 0.0
    %1052 = vmatpush1.msra.mxu0 0.0
    %1053 = vmatprep.subr.mxu0 0.0
    %1054 = vmatpush1.msra.mxu0 0.0
    %1055 = vmatprep.subr.mxu0 0.0
    %1056 = vmatpush1.msra.mxu0 0.0
    %1057 = vmatprep.subr.mxu0 0.0
    %1058 = vmatpush1.msra.mxu0 0.0
    %1059 = vmatprep.subr.mxu0 0.0
    %1060 = vmatpush1.msra.mxu0 0.0
    %1061 = vmatprep.subr.mxu0 0.0
    %1062 = vmatpush1.msra.mxu0 0.0
    %1063 = vmatprep.subr.mxu0 0.0
    %1064 = vmatpush1.msra.mxu0 0.0
    %1065 = vmatprep.subr.mxu0 0.0
    %1066 = vmatpush1.msra.mxu0 0.0
    %1067 = vmatprep.subr.mxu0 0.0
    %1068 = vmatpush1.msra.mxu0 0.0
    %1069 = vmatprep.subr.mxu0 0.0
    %1070 = vmatpush1.msra.mxu0 0.0
    %1071 = vmatprep.subr.mxu0 0.0
    %1072 = vmatpush1.msra.mxu0 0.0
    %1073 = vmatprep.subr.mxu0 0.0
    %1074 = vmatpush1.msra.mxu0 0.0
    %1075 = vmatprep.subr.mxu0 0.0
    %1076 = vmatpush1.msra.mxu0 0.0
    %1077 = vmatprep.subr.mxu0 0.0
    %1078 = vmatpush1.msra.mxu0 0.0
    %1079 = vmatprep.subr.mxu0 0.0
    %1080 = vmatpush1.msra.mxu0 0.0
    %1081 = vmatprep.subr.mxu0 0.0
    %1082 = vmatpush1.msra.mxu0 0.0
    %1083 = vmatprep.subr.mxu0 0.0
    %1084 = vmatpush1.msra.mxu0 0.0
    %1085 = vmatprep.mubr.f32.mxu0 0.0
    %1086 = vmatmul.mubr.f32.gmra.mrb[0].mxu0 %v1016
    %v1087 = vpop.f32.mrb[0].mxu0
    %v1088 = vadd.f32 0.0, %v1087
    %v1089 = vpop.f32.mrb[0].mxu0
    %1090 = vmatprep.mubr.f32.mxu0 0.0
    %1091 = vmatmul.mubr.f32.gmra.mrb[0].mxu0 %v1019
    %v1092 = vpop.f32.mrb[0].mxu0
    %v1093 = vadd.f32 0.0, %v1092
    %v1094 = vpop.f32.mrb[0].mxu0
    %1095 = vdwg.mxu0
    %1098 = vrot.lane.b32.xlu0 %v1088, 96
    %v1099 = vpop.permute.xlu0 %1098
    %1100 = vrot.lane.b32.xlu0 %v1093, 96
    %v1101 = vpop.permute.xlu0 %1100
    %v1104 = vadd.f32 %v886, %v1099
    %v1105 = vadd.f32 %v891, %v1101
    %v1106 = vadd.f32 %v1104, %v502
    %v1107 = vadd.f32 %v1105, %v502
    %v1108 = vmax.f32 %v1106, 0.0
    %v1109 = vmax.f32 %v1107, 0.0
    %1112 = vrot.lane.b32.xlu0 %v1108, 32
    %v1113 = vpop.permute.xlu0 %1112
    %1114 = vrot.lane.b32.xlu0 %v1109, 32
    %v1115 = vpop.permute.xlu0 %1114
    %1118 = vst.msk [vmem:[#allocation8] sm:$0xff] %vm206, %v1113
    %1119 = vst.msk [vmem:[#allocation8 + $0x8] sm:$0xff] %vm206, %v1115
    // Predicated region
    $region30: #{mpnn_fwd_pallas.1} parent=1 // pred_check
      _
    $region31: #{mpnn_fwd_pallas.1} parent=1 // pred_check_branch
      %1121 = sbr.rel (0) target = $region33
    $region32: #{mpnn_fwd_pallas.1} parent=1 // pred_region
      %s1123 = ssub.s32 256, 256
      %1124 = vsyncadd [#allocation4], %s1123
      %s1125 = sshll.u32 [#allocation8], 4
      %s1126 = int_to_ptr.vmem [resolvable:$true] %s1125
      %1131 = dma.vmem_to_hbm [thread:$0]  %s1126, 256, %s4, [#allocation4], 128, 128, 8
    $region33: #{mpnn_fwd_pallas.1} parent=1 // pred_fallthru
      _
    // Predicated region
    $region34: #{mpnn_fwd_pallas.1} parent=1 // pred_check
      _
    $region35: #{mpnn_fwd_pallas.1} parent=1 // pred_check_branch
      %1133 = sbr.rel (0) target = $region37
    $region36: #{mpnn_fwd_pallas.1} parent=1 // pred_region
      %1134 = dma.done [#allocation4], 256
    $region37: #{mpnn_fwd_pallas.1} parent=1 // pred_fallthru
      _
    %1135 = vsyncpa [#allocation3], 1
    %1136 = vsyncpa [#allocation6], 1
    %1137 = vsyncpa [#allocation4], 1

</llo_original>
